<compile_context>
chip_gen: v5e
topology: v5e:2x2
jax: 0.10.0
libtpu: 0.0.40
codegen_flags: <defaults>
</compile_context>

<pallas_src>
import numpy as np
import jax
import jax.numpy as jnp
from jax import lax
from jax.experimental import pallas as pl
from jax.experimental.pallas import tpu as pltpu


# ------------------------------ Pallas kernel ------------------------------ #
def _make_lstm_kernel(seq_len: int, batch_tile: int, n_dir: int, hidden: int,
                      vocab_pad: int):
    S, TB = seq_len, batch_tile
    HH = n_dir * hidden               # fused hidden width (all directions)
    G = 4 * HH                        # fused gate width [i | f | g | o] x dirs

    def kernel(inds_ref, table_ref, wih_ref, whh_ref, b_ref, out_ref):
        # ---- embedding lookup for the whole batch tile as a one-hot MXU matmul.
        # Row t*TB + b == token of tile-sequence b at time t (forward order).
        ids = inds_ref[...]                                          # (TB*S, 1)
        iota_v = lax.broadcasted_iota(jnp.int32, (TB * S, vocab_pad), 1)
        onehot = (ids == iota_v).astype(jnp.float32)
        emb = jnp.dot(onehot, table_ref[...],
                      preferred_element_type=jnp.float32)            # (TB*S, D)

        # ---- input projection for ALL timesteps and BOTH directions at once
        x_all = jnp.dot(emb, wih_ref[...],
                        preferred_element_type=jnp.float32) + b_ref[...]  # (TB*S, G)

        # Lane mask: which gate columns belong to the forward direction.
        if n_dir == 2:
            lane = lax.broadcasted_iota(jnp.int32, (1, G), 1)
            fwd_mask = (lane >= 0) & (lane < hidden)
            for gidx in range(1, 4):
                fwd_mask = fwd_mask | ((lane >= gidx * HH) &
                                       (lane < gidx * HH + hidden))

        # Critical-path recurrent matmul in bf16 (f32 accumulate, f32 state).
        whh_bf = whh_ref[...].astype(jnp.bfloat16)                   # (HH, G)

        h = jnp.zeros((TB, HH), jnp.float32)
        c = jnp.zeros((TB, HH), jnp.float32)
        # S is tiny -> fully unrolled. TODO(synk): switch to lax.fori_loop with
        # a VMEM scratch for x_all if S grows beyond ~32.
        for t in range(S):
            x_t = x_all[t * TB:(t + 1) * TB, :]                      # forward dir
            if n_dir == 2:
                x_rev = x_all[(S - 1 - t) * TB:(S - t) * TB, :]      # backward dir
                x_t = jnp.where(fwd_mask, x_t, x_rev)
            gates = x_t + jnp.dot(h.astype(jnp.bfloat16), whh_bf,
                                  preferred_element_type=jnp.float32)  # (TB, G)
            # One sigmoid over the whole gate slab; g-gate columns were
            # pre-scaled by 2 so tanh(z) = 2*sigmoid(2z) - 1 is a VPU fixup.
            sg = jax.nn.sigmoid(gates)
            i_g = sg[:, 0 * HH:1 * HH]
            f_g = sg[:, 1 * HH:2 * HH]
            g_g = 2.0 * sg[:, 2 * HH:3 * HH] - 1.0
            o_g = sg[:, 3 * HH:4 * HH]
            c = f_g * c + i_g * g_g
            h = o_g * jnp.tanh(c)

        out_ref[...] = h.astype(out_ref.dtype)                       # [h_f | h_b]

    return kernel


# --------------- init-time (host-side) weight fusion / padding --------------- #
def precompute_lstm_encoder(params, bidir: bool = True):
    """Run once at model init. Pads the embedding table to a lane-friendly row
    count and fuses both directions' LSTM weights into lane-dense slabs:
    gate columns [i_f i_b | f_f f_b | g_f g_b | o_f o_b], PyTorch gate order,
    bias = b_ih + b_hh, and a x2 fold on the g-gate for the tanh-via-sigmoid
    trick used in the kernel."""
    emb = np.asarray(params["embedding"], np.float32)
    vocab_rows, dim = emb.shape
    hidden = int(params["f_w_hh"].shape[1])
    n_dir = 2 if bidir else 1
    HH = n_dir * hidden
    G = 4 * HH

    vocab_pad = ((vocab_rows + 127) // 128) * 128
    table = np.zeros((vocab_pad, dim), np.float32)
    table[:vocab_rows] = emb

    wih = np.zeros((dim, G), np.float32)     # shared embedding -> both directions
    whh = np.zeros((HH, G), np.float32)      # block structure per direction
    bias_row = np.zeros((1, G), np.float32)
    for d, p in enumerate(["f_", "b_"][:n_dir]):
        w_ih_t = np.asarray(params[p + "w_ih"], np.float32).T        # (D, 4H)
        w_hh_t = np.asarray(params[p + "w_hh"], np.float32).T        # (H, 4H)
        bb = (np.asarray(params[p + "b_ih"], np.float32) +
              np.asarray(params[p + "b_hh"], np.float32))
        for g in range(4):                                           # i, f, g, o
            scale = 2.0 if g == 2 else 1.0
            col = g * HH + d * hidden
            wih[:, col:col + hidden] = scale * w_ih_t[:, g * hidden:(g + 1) * hidden]
            whh[d * hidden:(d + 1) * hidden, col:col + hidden] = (
                scale * w_hh_t[:, g * hidden:(g + 1) * hidden])
            bias_row[0, col:col + hidden] = scale * bb[g * hidden:(g + 1) * hidden]

    return {
        "table": jnp.asarray(table), "wih": jnp.asarray(wih),
        "whh": jnp.asarray(whh), "b": jnp.asarray(bias_row),
        "hidden": hidden, "n_dir": n_dir,
    }


# ------------------------------ batched forward ------------------------------ #
def lstm_encoder_forward(inds_batch, fused, batch_tile: int = 8):
    """inds_batch: (B, S) int token-id sequences (stand-in for coder(stack_id)
    per stack). Returns (B, hid_dim) final hidden states [h_forward | h_backward]."""
    # TODO(synk): coder(stack_id) tokenization is host-side Python; precomputed
    # integer index sequences are supplied instead.
    table, wih, whh, bias_row = fused["table"], fused["wih"], fused["whh"], fused["b"]
    hidden, n_dir = fused["hidden"], fused["n_dir"]
    vocab_pad, dim = table.shape
    HH = n_dir * hidden
    G = 4 * HH
    B, S = int(inds_batch.shape[0]), int(inds_batch.shape[1])

    TB = batch_tile
    n_tiles = -(-B // TB)
    Bp = n_tiles * TB
    inds_p = jnp.zeros((Bp, S), jnp.int32).at[:B].set(inds_batch.astype(jnp.int32))
    # Time-major within each batch tile so the kernel reads one contiguous
    # (TB, G) row slab per timestep (no in-kernel relayout).
    inds_arr = (inds_p.reshape(n_tiles, TB, S)
                      .transpose(0, 2, 1)
                      .reshape(Bp * S, 1))

    kernel = _make_lstm_kernel(S, TB, n_dir, hidden, vocab_pad)
    out = pl.pallas_call(
        kernel,
        out_shape=jax.ShapeDtypeStruct((Bp, HH), jnp.float32),
        grid=(n_tiles,),
        in_specs=[
            pl.BlockSpec((TB * S, 1), lambda n: (n, 0)),      # indices (per tile)
            pl.BlockSpec((vocab_pad, dim), lambda n: (0, 0)), # embedding table
            pl.BlockSpec((dim, G), lambda n: (0, 0)),         # fused W_ih
            pl.BlockSpec((HH, G), lambda n: (0, 0)),          # fused W_hh
            pl.BlockSpec((1, G), lambda n: (0, 0)),           # fused bias
        ],
        out_specs=pl.BlockSpec((TB, HH), lambda n: (n, 0)),
        compiler_params=pltpu.CompilerParams(
            dimension_semantics=("parallel",)),               # megacore on v7x
    )(inds_arr, table, wih, whh, bias_row)
    return out[:B]                                            # (B, hid_dim)


# ------------------------------ reference (JAX) ----------------------------- #
def _lstm_ref(emb, w_ih, w_hh, b_ih, b_hh):
    H = w_hh.shape[1]

    def step(carry, x):
        h, c = carry
        gates = x @ w_ih.T + b_ih + h @ w_hh.T + b_hh
        i = jax.nn.sigmoid(gates[0 * H:1 * H])
        f = jax.nn.sigmoid(gates[1 * H:2 * H])
        g = jnp.tanh(gates[2 * H:3 * H])
        o = jax.nn.sigmoid(gates[3 * H:4 * H])
        c = f * c + i * g
        h = o * jnp.tanh(c)
        return (h, c), None

    (h, _), _ = lax.scan(step, (jnp.zeros(H), jnp.zeros(H)), emb)
    return h


def ref_forward(inds, params, bidir=True):
    emb_table = params["embedding"]
    out = _lstm_ref(emb_table[inds], params["f_w_ih"], params["f_w_hh"],
                    params["f_b_ih"], params["f_b_hh"])
    if bidir:
        out_b = _lstm_ref(emb_table[inds[::-1]], params["b_w_ih"], params["b_w_hh"],
                          params["b_b_ih"], params["b_b_hh"])
        out = jnp.concatenate([out, out_b])
    return out


# ----------------------------------- main ----------------------------------- #
if __name__ == "__main__":
    # Small shapes consistent with the module: dim=32, hid_dim=32, bidir=True
    # -> per-direction hidden_dim = 16; sequence length 8; vocab 20 (+1 row);
    # batch of 16 independent "stacks" encoded in one kernel call.
    dim, hid_dim, bidir = 32, 32, True
    hidden_dim = hid_dim // 2 if bidir else hid_dim
    vocab, seq_len, batch = 20, 8, 16

    key = jax.random.PRNGKey(0)
    ks = jax.random.split(key, 10)
    scale = 0.1
    params = {
        "embedding": scale * jax.random.normal(ks[0], (vocab + 1, dim), jnp.float32),
        "f_w_ih": scale * jax.random.normal(ks[1], (4 * hidden_dim, dim), jnp.float32),
        "f_w_hh": scale * jax.random.normal(ks[2], (4 * hidden_dim, hidden_dim), jnp.float32),
        "f_b_ih": scale * jax.random.normal(ks[3], (4 * hidden_dim,), jnp.float32),
        "f_b_hh": scale * jax.random.normal(ks[4], (4 * hidden_dim,), jnp.float32),
        "b_w_ih": scale * jax.random.normal(ks[5], (4 * hidden_dim, dim), jnp.float32),
        "b_w_hh": scale * jax.random.normal(ks[6], (4 * hidden_dim, hidden_dim), jnp.float32),
        "b_b_ih": scale * jax.random.normal(ks[7], (4 * hidden_dim,), jnp.float32),
        "b_b_hh": scale * jax.random.normal(ks[8], (4 * hidden_dim,), jnp.float32),
    }

    # "coder(stack_id)" stand-in: deterministic token index sequences.
    inds_batch = jax.random.randint(ks[9], (batch, seq_len), 0, vocab + 1,
                                    dtype=jnp.int32)

    fused = precompute_lstm_encoder(params, bidir=bidir)      # init-time, once
    out = lstm_encoder_forward(inds_batch, fused, batch_tile=8)
    out = jax.block_until_ready(out)
    assert out.shape == (batch, hid_dim), out.shape

    ref = jax.vmap(lambda idx: ref_forward(idx, params, bidir=bidir))(inds_batch)
    assert jnp.allclose(out, ref, atol=5e-3, rtol=5e-3), (out, ref)

    print("KERNEL_OK")
</pallas_src>

<mosaic_0001>
module attributes {stable_mosaic.version = 11 : i64} {
  func.func @kernel(%arg0: i32, %arg1: memref<64x1xi32, #tpu.memory_space<vmem>>, %arg2: memref<128x32xf32, #tpu.memory_space<vmem>>, %arg3: memref<32x128xf32, #tpu.memory_space<vmem>>, %arg4: memref<32x128xf32, #tpu.memory_space<vmem>>, %arg5: memref<1x128xf32, #tpu.memory_space<vmem>>, %arg6: memref<8x32xf32, #tpu.memory_space<vmem>>) attributes {dimension_semantics = [#tpu.dimension_semantics<parallel>], iteration_bounds = array<i64: 2>, scalar_prefetch = 0 : i64, scratch_operands = 0 : i64, tpu.core_type = #tpu.core_type<tc>, window_params = [{transform_indices = @transform_0, window_bounds = array<i64: 64, 1>}, {pipeline_mode = #tpu.pipeline_mode<synchronous>, transform_indices = @transform_1, window_bounds = array<i64: 128, 32>}, {pipeline_mode = #tpu.pipeline_mode<synchronous>, transform_indices = @transform_2, window_bounds = array<i64: 32, 128>}, {pipeline_mode = #tpu.pipeline_mode<synchronous>, transform_indices = @transform_3, window_bounds = array<i64: 32, 128>}, {pipeline_mode = #tpu.pipeline_mode<synchronous>, transform_indices = @transform_4, window_bounds = array<i64: 1, 128>}, {transform_indices = @transform_5, window_bounds = array<i64: 8, 32>}]} {
    %c0 = arith.constant 0 : index
    %c0_0 = arith.constant 0 : index
    %0 = vector.load %arg1[%c0, %c0_0] : memref<64x1xi32, #tpu.memory_space<vmem>>, vector<64x1xi32>
    %1 = tpu.iota {dimensions = array<i32: 1>} : vector<64x128xi32>
    %2 = vector.broadcast %0 : vector<64x1xi32> to vector<64x128xi32>
    %3 = arith.cmpi eq, %2, %1 : vector<64x128xi32>
    %4 = arith.extui %3 : vector<64x128xi1> to vector<64x128xi32>
    %5 = arith.sitofp %4 : vector<64x128xi32> to vector<64x128xf32>
    %c0_1 = arith.constant 0 : index
    %c0_2 = arith.constant 0 : index
    %6 = vector.load %arg2[%c0_1, %c0_2] : memref<128x32xf32, #tpu.memory_space<vmem>>, vector<128x32xf32>
    %cst = arith.constant dense<0.000000e+00> : vector<64x32xf32>
    %7 = tpu.matmul %5, %6, %cst {dimension_numbers = #tpu.dot_dimension_numbers<[1], [0], [0], [1], [0, 0, 1, 1], [], []>} : vector<64x128xf32>, vector<128x32xf32>, vector<64x32xf32> -> vector<64x32xf32>
    %c0_3 = arith.constant 0 : index
    %c0_4 = arith.constant 0 : index
    %8 = vector.load %arg3[%c0_3, %c0_4] : memref<32x128xf32, #tpu.memory_space<vmem>>, vector<32x128xf32>
    %cst_5 = arith.constant dense<0.000000e+00> : vector<64x128xf32>
    %9 = tpu.matmul %7, %8, %cst_5 {dimension_numbers = #tpu.dot_dimension_numbers<[1], [0], [0], [1], [0, 0, 1, 1], [], []>} : vector<64x32xf32>, vector<32x128xf32>, vector<64x128xf32> -> vector<64x128xf32>
    %c0_6 = arith.constant 0 : index
    %c0_7 = arith.constant 0 : index
    %10 = vector.load %arg5[%c0_6, %c0_7] : memref<1x128xf32, #tpu.memory_space<vmem>>, vector<1x128xf32>
    %11 = vector.broadcast %10 : vector<1x128xf32> to vector<64x128xf32>
    %12 = arith.addf %9, %11 : vector<64x128xf32>
    %13 = tpu.iota {dimensions = array<i32: 1>} : vector<1x128xi32>
    %c0_i32 = arith.constant 0 : i32
    %14 = vector.broadcast %c0_i32 : i32 to vector<1x128xi32>
    %15 = arith.cmpi sge, %13, %14 : vector<1x128xi32>
    %c16_i32 = arith.constant 16 : i32
    %16 = vector.broadcast %c16_i32 : i32 to vector<1x128xi32>
    %17 = arith.cmpi slt, %13, %16 : vector<1x128xi32>
    %18 = arith.andi %15, %17 : vector<1x128xi1>
    %c32_i32 = arith.constant 32 : i32
    %19 = vector.broadcast %c32_i32 : i32 to vector<1x128xi32>
    %20 = arith.cmpi sge, %13, %19 : vector<1x128xi32>
    %c48_i32 = arith.constant 48 : i32
    %21 = vector.broadcast %c48_i32 : i32 to vector<1x128xi32>
    %22 = arith.cmpi slt, %13, %21 : vector<1x128xi32>
    %23 = arith.andi %20, %22 : vector<1x128xi1>
    %24 = arith.ori %18, %23 : vector<1x128xi1>
    %c64_i32 = arith.constant 64 : i32
    %25 = vector.broadcast %c64_i32 : i32 to vector<1x128xi32>
    %26 = arith.cmpi sge, %13, %25 : vector<1x128xi32>
    %c80_i32 = arith.constant 80 : i32
    %27 = vector.broadcast %c80_i32 : i32 to vector<1x128xi32>
    %28 = arith.cmpi slt, %13, %27 : vector<1x128xi32>
    %29 = arith.andi %26, %28 : vector<1x128xi1>
    %30 = arith.ori %24, %29 : vector<1x128xi1>
    %c96_i32 = arith.constant 96 : i32
    %31 = vector.broadcast %c96_i32 : i32 to vector<1x128xi32>
    %32 = arith.cmpi sge, %13, %31 : vector<1x128xi32>
    %c112_i32 = arith.constant 112 : i32
    %33 = vector.broadcast %c112_i32 : i32 to vector<1x128xi32>
    %34 = arith.cmpi slt, %13, %33 : vector<1x128xi32>
    %35 = arith.andi %32, %34 : vector<1x128xi1>
    %36 = arith.ori %30, %35 : vector<1x128xi1>
    %c0_8 = arith.constant 0 : index
    %c0_9 = arith.constant 0 : index
    %37 = vector.load %arg4[%c0_8, %c0_9] : memref<32x128xf32, #tpu.memory_space<vmem>>, vector<32x128xf32>
    %38 = arith.truncf %37 : vector<32x128xf32> to vector<32x128xbf16>
    %cst_10 = arith.constant 0.000000e+00 : f32
    %39 = vector.broadcast %cst_10 : f32 to vector<8x32xf32>
    %cst_11 = arith.constant 0.000000e+00 : f32
    %40 = vector.broadcast %cst_11 : f32 to vector<8x32xf32>
    %41 = vector.extract_strided_slice %12 {offsets = [0, 0], sizes = [8, 128], strides = [1, 1]} : vector<64x128xf32> to vector<8x128xf32>
    %42 = vector.extract_strided_slice %12 {offsets = [56, 0], sizes = [8, 128], strides = [1, 1]} : vector<64x128xf32> to vector<8x128xf32>
    %43 = vector.shape_cast %36 : vector<1x128xi1> to vector<1x128xi1>
    %44 = vector.broadcast %43 : vector<1x128xi1> to vector<8x128xi1>
    %45 = arith.select %44, %41, %42 : vector<8x128xi1>, vector<8x128xf32>
    %46 = arith.truncf %39 : vector<8x32xf32> to vector<8x32xbf16>
    %cst_12 = arith.constant dense<0.000000e+00> : vector<8x128xf32>
    %47 = tpu.matmul %46, %38, %cst_12 {dimension_numbers = #tpu.dot_dimension_numbers<[1], [0], [0], [1], [0, 0, 1, 1], [], []>} : vector<8x32xbf16>, vector<32x128xbf16>, vector<8x128xf32> -> vector<8x128xf32>
    %48 = arith.addf %45, %47 : vector<8x128xf32>
    %49 = arith.negf %48 : vector<8x128xf32>
    %50 = math.exp %49 : vector<8x128xf32>
    %cst_13 = arith.constant 1.000000e+00 : f32
    %51 = vector.broadcast %cst_13 : f32 to vector<8x128xf32>
    %52 = arith.addf %51, %50 : vector<8x128xf32>
    %53 = arith.divf %51, %52 : vector<8x128xf32>
    %54 = vector.extract_strided_slice %53 {offsets = [0, 0], sizes = [8, 32], strides = [1, 1]} : vector<8x128xf32> to vector<8x32xf32>
    %55 = vector.extract_strided_slice %53 {offsets = [0, 32], sizes = [8, 32], strides = [1, 1]} : vector<8x128xf32> to vector<8x32xf32>
    %56 = vector.extract_strided_slice %53 {offsets = [0, 64], sizes = [8, 32], strides = [1, 1]} : vector<8x128xf32> to vector<8x32xf32>
    %cst_14 = arith.constant 2.000000e+00 : f32
    %57 = vector.broadcast %cst_14 : f32 to vector<8x32xf32>
    %58 = arith.mulf %57, %56 : vector<8x32xf32>
    %cst_15 = arith.constant 1.000000e+00 : f32
    %59 = vector.broadcast %cst_15 : f32 to vector<8x32xf32>
    %60 = arith.subf %58, %59 : vector<8x32xf32>
    %61 = vector.extract_strided_slice %53 {offsets = [0, 96], sizes = [8, 32], strides = [1, 1]} : vector<8x128xf32> to vector<8x32xf32>
    %62 = arith.mulf %55, %40 : vector<8x32xf32>
    %63 = arith.mulf %54, %60 : vector<8x32xf32>
    %64 = arith.addf %62, %63 : vector<8x32xf32>
    %65 = math.tanh %64 : vector<8x32xf32>
    %66 = arith.mulf %61, %65 : vector<8x32xf32>
    %67 = vector.extract_strided_slice %12 {offsets = [8, 0], sizes = [8, 128], strides = [1, 1]} : vector<64x128xf32> to vector<8x128xf32>
    %68 = vector.extract_strided_slice %12 {offsets = [48, 0], sizes = [8, 128], strides = [1, 1]} : vector<64x128xf32> to vector<8x128xf32>
    %69 = vector.shape_cast %36 : vector<1x128xi1> to vector<1x128xi1>
    %70 = vector.broadcast %69 : vector<1x128xi1> to vector<8x128xi1>
    %71 = arith.select %70, %67, %68 : vector<8x128xi1>, vector<8x128xf32>
    %72 = arith.truncf %66 : vector<8x32xf32> to vector<8x32xbf16>
    %cst_16 = arith.constant dense<0.000000e+00> : vector<8x128xf32>
    %73 = tpu.matmul %72, %38, %cst_16 {dimension_numbers = #tpu.dot_dimension_numbers<[1], [0], [0], [1], [0, 0, 1, 1], [], []>} : vector<8x32xbf16>, vector<32x128xbf16>, vector<8x128xf32> -> vector<8x128xf32>
    %74 = arith.addf %71, %73 : vector<8x128xf32>
    %75 = arith.negf %74 : vector<8x128xf32>
    %76 = math.exp %75 : vector<8x128xf32>
    %cst_17 = arith.constant 1.000000e+00 : f32
    %77 = vector.broadcast %cst_17 : f32 to vector<8x128xf32>
    %78 = arith.addf %77, %76 : vector<8x128xf32>
    %79 = arith.divf %77, %78 : vector<8x128xf32>
    %80 = vector.extract_strided_slice %79 {offsets = [0, 0], sizes = [8, 32], strides = [1, 1]} : vector<8x128xf32> to vector<8x32xf32>
    %81 = vector.extract_strided_slice %79 {offsets = [0, 32], sizes = [8, 32], strides = [1, 1]} : vector<8x128xf32> to vector<8x32xf32>
    %82 = vector.extract_strided_slice %79 {offsets = [0, 64], sizes = [8, 32], strides = [1, 1]} : vector<8x128xf32> to vector<8x32xf32>
    %cst_18 = arith.constant 2.000000e+00 : f32
    %83 = vector.broadcast %cst_18 : f32 to vector<8x32xf32>
    %84 = arith.mulf %83, %82 : vector<8x32xf32>
    %cst_19 = arith.constant 1.000000e+00 : f32
    %85 = vector.broadcast %cst_19 : f32 to vector<8x32xf32>
    %86 = arith.subf %84, %85 : vector<8x32xf32>
    %87 = vector.extract_strided_slice %79 {offsets = [0, 96], sizes = [8, 32], strides = [1, 1]} : vector<8x128xf32> to vector<8x32xf32>
    %88 = arith.mulf %81, %64 : vector<8x32xf32>
    %89 = arith.mulf %80, %86 : vector<8x32xf32>
    %90 = arith.addf %88, %89 : vector<8x32xf32>
    %91 = math.tanh %90 : vector<8x32xf32>
    %92 = arith.mulf %87, %91 : vector<8x32xf32>
    %93 = vector.extract_strided_slice %12 {offsets = [16, 0], sizes = [8, 128], strides = [1, 1]} : vector<64x128xf32> to vector<8x128xf32>
    %94 = vector.extract_strided_slice %12 {offsets = [40, 0], sizes = [8, 128], strides = [1, 1]} : vector<64x128xf32> to vector<8x128xf32>
    %95 = vector.shape_cast %36 : vector<1x128xi1> to vector<1x128xi1>
    %96 = vector.broadcast %95 : vector<1x128xi1> to vector<8x128xi1>
    %97 = arith.select %96, %93, %94 : vector<8x128xi1>, vector<8x128xf32>
    %98 = arith.truncf %92 : vector<8x32xf32> to vector<8x32xbf16>
    %cst_20 = arith.constant dense<0.000000e+00> : vector<8x128xf32>
    %99 = tpu.matmul %98, %38, %cst_20 {dimension_numbers = #tpu.dot_dimension_numbers<[1], [0], [0], [1], [0, 0, 1, 1], [], []>} : vector<8x32xbf16>, vector<32x128xbf16>, vector<8x128xf32> -> vector<8x128xf32>
    %100 = arith.addf %97, %99 : vector<8x128xf32>
    %101 = arith.negf %100 : vector<8x128xf32>
    %102 = math.exp %101 : vector<8x128xf32>
    %cst_21 = arith.constant 1.000000e+00 : f32
    %103 = vector.broadcast %cst_21 : f32 to vector<8x128xf32>
    %104 = arith.addf %103, %102 : vector<8x128xf32>
    %105 = arith.divf %103, %104 : vector<8x128xf32>
    %106 = vector.extract_strided_slice %105 {offsets = [0, 0], sizes = [8, 32], strides = [1, 1]} : vector<8x128xf32> to vector<8x32xf32>
    %107 = vector.extract_strided_slice %105 {offsets = [0, 32], sizes = [8, 32], strides = [1, 1]} : vector<8x128xf32> to vector<8x32xf32>
    %108 = vector.extract_strided_slice %105 {offsets = [0, 64], sizes = [8, 32], strides = [1, 1]} : vector<8x128xf32> to vector<8x32xf32>
    %cst_22 = arith.constant 2.000000e+00 : f32
    %109 = vector.broadcast %cst_22 : f32 to vector<8x32xf32>
    %110 = arith.mulf %109, %108 : vector<8x32xf32>
    %cst_23 = arith.constant 1.000000e+00 : f32
    %111 = vector.broadcast %cst_23 : f32 to vector<8x32xf32>
    %112 = arith.subf %110, %111 : vector<8x32xf32>
    %113 = vector.extract_strided_slice %105 {offsets = [0, 96], sizes = [8, 32], strides = [1, 1]} : vector<8x128xf32> to vector<8x32xf32>
    %114 = arith.mulf %107, %90 : vector<8x32xf32>
    %115 = arith.mulf %106, %112 : vector<8x32xf32>
    %116 = arith.addf %114, %115 : vector<8x32xf32>
    %117 = math.tanh %116 : vector<8x32xf32>
    %118 = arith.mulf %113, %117 : vector<8x32xf32>
    %119 = vector.extract_strided_slice %12 {offsets = [24, 0], sizes = [8, 128], strides = [1, 1]} : vector<64x128xf32> to vector<8x128xf32>
    %120 = vector.extract_strided_slice %12 {offsets = [32, 0], sizes = [8, 128], strides = [1, 1]} : vector<64x128xf32> to vector<8x128xf32>
    %121 = vector.shape_cast %36 : vector<1x128xi1> to vector<1x128xi1>
    %122 = vector.broadcast %121 : vector<1x128xi1> to vector<8x128xi1>
    %123 = arith.select %122, %119, %120 : vector<8x128xi1>, vector<8x128xf32>
    %124 = arith.truncf %118 : vector<8x32xf32> to vector<8x32xbf16>
    %cst_24 = arith.constant dense<0.000000e+00> : vector<8x128xf32>
    %125 = tpu.matmul %124, %38, %cst_24 {dimension_numbers = #tpu.dot_dimension_numbers<[1], [0], [0], [1], [0, 0, 1, 1], [], []>} : vector<8x32xbf16>, vector<32x128xbf16>, vector<8x128xf32> -> vector<8x128xf32>
    %126 = arith.addf %123, %125 : vector<8x128xf32>
    %127 = arith.negf %126 : vector<8x128xf32>
    %128 = math.exp %127 : vector<8x128xf32>
    %cst_25 = arith.constant 1.000000e+00 : f32
    %129 = vector.broadcast %cst_25 : f32 to vector<8x128xf32>
    %130 = arith.addf %129, %128 : vector<8x128xf32>
    %131 = arith.divf %129, %130 : vector<8x128xf32>
    %132 = vector.extract_strided_slice %131 {offsets = [0, 0], sizes = [8, 32], strides = [1, 1]} : vector<8x128xf32> to vector<8x32xf32>
    %133 = vector.extract_strided_slice %131 {offsets = [0, 32], sizes = [8, 32], strides = [1, 1]} : vector<8x128xf32> to vector<8x32xf32>
    %134 = vector.extract_strided_slice %131 {offsets = [0, 64], sizes = [8, 32], strides = [1, 1]} : vector<8x128xf32> to vector<8x32xf32>
    %cst_26 = arith.constant 2.000000e+00 : f32
    %135 = vector.broadcast %cst_26 : f32 to vector<8x32xf32>
    %136 = arith.mulf %135, %134 : vector<8x32xf32>
    %cst_27 = arith.constant 1.000000e+00 : f32
    %137 = vector.broadcast %cst_27 : f32 to vector<8x32xf32>
    %138 = arith.subf %136, %137 : vector<8x32xf32>
    %139 = vector.extract_strided_slice %131 {offsets = [0, 96], sizes = [8, 32], strides = [1, 1]} : vector<8x128xf32> to vector<8x32xf32>
    %140 = arith.mulf %133, %116 : vector<8x32xf32>
    %141 = arith.mulf %132, %138 : vector<8x32xf32>
    %142 = arith.addf %140, %141 : vector<8x32xf32>
    %143 = math.tanh %142 : vector<8x32xf32>
    %144 = arith.mulf %139, %143 : vector<8x32xf32>
    %145 = vector.extract_strided_slice %12 {offsets = [32, 0], sizes = [8, 128], strides = [1, 1]} : vector<64x128xf32> to vector<8x128xf32>
    %146 = vector.extract_strided_slice %12 {offsets = [24, 0], sizes = [8, 128], strides = [1, 1]} : vector<64x128xf32> to vector<8x128xf32>
    %147 = vector.shape_cast %36 : vector<1x128xi1> to vector<1x128xi1>
    %148 = vector.broadcast %147 : vector<1x128xi1> to vector<8x128xi1>
    %149 = arith.select %148, %145, %146 : vector<8x128xi1>, vector<8x128xf32>
    %150 = arith.truncf %144 : vector<8x32xf32> to vector<8x32xbf16>
    %cst_28 = arith.constant dense<0.000000e+00> : vector<8x128xf32>
    %151 = tpu.matmul %150, %38, %cst_28 {dimension_numbers = #tpu.dot_dimension_numbers<[1], [0], [0], [1], [0, 0, 1, 1], [], []>} : vector<8x32xbf16>, vector<32x128xbf16>, vector<8x128xf32> -> vector<8x128xf32>
    %152 = arith.addf %149, %151 : vector<8x128xf32>
    %153 = arith.negf %152 : vector<8x128xf32>
    %154 = math.exp %153 : vector<8x128xf32>
    %cst_29 = arith.constant 1.000000e+00 : f32
    %155 = vector.broadcast %cst_29 : f32 to vector<8x128xf32>
    %156 = arith.addf %155, %154 : vector<8x128xf32>
    %157 = arith.divf %155, %156 : vector<8x128xf32>
    %158 = vector.extract_strided_slice %157 {offsets = [0, 0], sizes = [8, 32], strides = [1, 1]} : vector<8x128xf32> to vector<8x32xf32>
    %159 = vector.extract_strided_slice %157 {offsets = [0, 32], sizes = [8, 32], strides = [1, 1]} : vector<8x128xf32> to vector<8x32xf32>
    %160 = vector.extract_strided_slice %157 {offsets = [0, 64], sizes = [8, 32], strides = [1, 1]} : vector<8x128xf32> to vector<8x32xf32>
    %cst_30 = arith.constant 2.000000e+00 : f32
    %161 = vector.broadcast %cst_30 : f32 to vector<8x32xf32>
    %162 = arith.mulf %161, %160 : vector<8x32xf32>
    %cst_31 = arith.constant 1.000000e+00 : f32
    %163 = vector.broadcast %cst_31 : f32 to vector<8x32xf32>
    %164 = arith.subf %162, %163 : vector<8x32xf32>
    %165 = vector.extract_strided_slice %157 {offsets = [0, 96], sizes = [8, 32], strides = [1, 1]} : vector<8x128xf32> to vector<8x32xf32>
    %166 = arith.mulf %159, %142 : vector<8x32xf32>
    %167 = arith.mulf %158, %164 : vector<8x32xf32>
    %168 = arith.addf %166, %167 : vector<8x32xf32>
    %169 = math.tanh %168 : vector<8x32xf32>
    %170 = arith.mulf %165, %169 : vector<8x32xf32>
    %171 = vector.extract_strided_slice %12 {offsets = [40, 0], sizes = [8, 128], strides = [1, 1]} : vector<64x128xf32> to vector<8x128xf32>
    %172 = vector.extract_strided_slice %12 {offsets = [16, 0], sizes = [8, 128], strides = [1, 1]} : vector<64x128xf32> to vector<8x128xf32>
    %173 = vector.shape_cast %36 : vector<1x128xi1> to vector<1x128xi1>
    %174 = vector.broadcast %173 : vector<1x128xi1> to vector<8x128xi1>
    %175 = arith.select %174, %171, %172 : vector<8x128xi1>, vector<8x128xf32>
    %176 = arith.truncf %170 : vector<8x32xf32> to vector<8x32xbf16>
    %cst_32 = arith.constant dense<0.000000e+00> : vector<8x128xf32>
    %177 = tpu.matmul %176, %38, %cst_32 {dimension_numbers = #tpu.dot_dimension_numbers<[1], [0], [0], [1], [0, 0, 1, 1], [], []>} : vector<8x32xbf16>, vector<32x128xbf16>, vector<8x128xf32> -> vector<8x128xf32>
    %178 = arith.addf %175, %177 : vector<8x128xf32>
    %179 = arith.negf %178 : vector<8x128xf32>
    %180 = math.exp %179 : vector<8x128xf32>
    %cst_33 = arith.constant 1.000000e+00 : f32
    %181 = vector.broadcast %cst_33 : f32 to vector<8x128xf32>
    %182 = arith.addf %181, %180 : vector<8x128xf32>
    %183 = arith.divf %181, %182 : vector<8x128xf32>
    %184 = vector.extract_strided_slice %183 {offsets = [0, 0], sizes = [8, 32], strides = [1, 1]} : vector<8x128xf32> to vector<8x32xf32>
    %185 = vector.extract_strided_slice %183 {offsets = [0, 32], sizes = [8, 32], strides = [1, 1]} : vector<8x128xf32> to vector<8x32xf32>
    %186 = vector.extract_strided_slice %183 {offsets = [0, 64], sizes = [8, 32], strides = [1, 1]} : vector<8x128xf32> to vector<8x32xf32>
    %cst_34 = arith.constant 2.000000e+00 : f32
    %187 = vector.broadcast %cst_34 : f32 to vector<8x32xf32>
    %188 = arith.mulf %187, %186 : vector<8x32xf32>
    %cst_35 = arith.constant 1.000000e+00 : f32
    %189 = vector.broadcast %cst_35 : f32 to vector<8x32xf32>
    %190 = arith.subf %188, %189 : vector<8x32xf32>
    %191 = vector.extract_strided_slice %183 {offsets = [0, 96], sizes = [8, 32], strides = [1, 1]} : vector<8x128xf32> to vector<8x32xf32>
    %192 = arith.mulf %185, %168 : vector<8x32xf32>
    %193 = arith.mulf %184, %190 : vector<8x32xf32>
    %194 = arith.addf %192, %193 : vector<8x32xf32>
    %195 = math.tanh %194 : vector<8x32xf32>
    %196 = arith.mulf %191, %195 : vector<8x32xf32>
    %197 = vector.extract_strided_slice %12 {offsets = [48, 0], sizes = [8, 128], strides = [1, 1]} : vector<64x128xf32> to vector<8x128xf32>
    %198 = vector.extract_strided_slice %12 {offsets = [8, 0], sizes = [8, 128], strides = [1, 1]} : vector<64x128xf32> to vector<8x128xf32>
    %199 = vector.shape_cast %36 : vector<1x128xi1> to vector<1x128xi1>
    %200 = vector.broadcast %199 : vector<1x128xi1> to vector<8x128xi1>
    %201 = arith.select %200, %197, %198 : vector<8x128xi1>, vector<8x128xf32>
    %202 = arith.truncf %196 : vector<8x32xf32> to vector<8x32xbf16>
    %cst_36 = arith.constant dense<0.000000e+00> : vector<8x128xf32>
    %203 = tpu.matmul %202, %38, %cst_36 {dimension_numbers = #tpu.dot_dimension_numbers<[1], [0], [0], [1], [0, 0, 1, 1], [], []>} : vector<8x32xbf16>, vector<32x128xbf16>, vector<8x128xf32> -> vector<8x128xf32>
    %204 = arith.addf %201, %203 : vector<8x128xf32>
    %205 = arith.negf %204 : vector<8x128xf32>
    %206 = math.exp %205 : vector<8x128xf32>
    %cst_37 = arith.constant 1.000000e+00 : f32
    %207 = vector.broadcast %cst_37 : f32 to vector<8x128xf32>
    %208 = arith.addf %207, %206 : vector<8x128xf32>
    %209 = arith.divf %207, %208 : vector<8x128xf32>
    %210 = vector.extract_strided_slice %209 {offsets = [0, 0], sizes = [8, 32], strides = [1, 1]} : vector<8x128xf32> to vector<8x32xf32>
    %211 = vector.extract_strided_slice %209 {offsets = [0, 32], sizes = [8, 32], strides = [1, 1]} : vector<8x128xf32> to vector<8x32xf32>
    %212 = vector.extract_strided_slice %209 {offsets = [0, 64], sizes = [8, 32], strides = [1, 1]} : vector<8x128xf32> to vector<8x32xf32>
    %cst_38 = arith.constant 2.000000e+00 : f32
    %213 = vector.broadcast %cst_38 : f32 to vector<8x32xf32>
    %214 = arith.mulf %213, %212 : vector<8x32xf32>
    %cst_39 = arith.constant 1.000000e+00 : f32
    %215 = vector.broadcast %cst_39 : f32 to vector<8x32xf32>
    %216 = arith.subf %214, %215 : vector<8x32xf32>
    %217 = vector.extract_strided_slice %209 {offsets = [0, 96], sizes = [8, 32], strides = [1, 1]} : vector<8x128xf32> to vector<8x32xf32>
    %218 = arith.mulf %211, %194 : vector<8x32xf32>
    %219 = arith.mulf %210, %216 : vector<8x32xf32>
    %220 = arith.addf %218, %219 : vector<8x32xf32>
    %221 = math.tanh %220 : vector<8x32xf32>
    %222 = arith.mulf %217, %221 : vector<8x32xf32>
    %223 = vector.extract_strided_slice %12 {offsets = [56, 0], sizes = [8, 128], strides = [1, 1]} : vector<64x128xf32> to vector<8x128xf32>
    %224 = vector.extract_strided_slice %12 {offsets = [0, 0], sizes = [8, 128], strides = [1, 1]} : vector<64x128xf32> to vector<8x128xf32>
    %225 = vector.shape_cast %36 : vector<1x128xi1> to vector<1x128xi1>
    %226 = vector.broadcast %225 : vector<1x128xi1> to vector<8x128xi1>
    %227 = arith.select %226, %223, %224 : vector<8x128xi1>, vector<8x128xf32>
    %228 = arith.truncf %222 : vector<8x32xf32> to vector<8x32xbf16>
    %cst_40 = arith.constant dense<0.000000e+00> : vector<8x128xf32>
    %229 = tpu.matmul %228, %38, %cst_40 {dimension_numbers = #tpu.dot_dimension_numbers<[1], [0], [0], [1], [0, 0, 1, 1], [], []>} : vector<8x32xbf16>, vector<32x128xbf16>, vector<8x128xf32> -> vector<8x128xf32>
    %230 = arith.addf %227, %229 : vector<8x128xf32>
    %231 = arith.negf %230 : vector<8x128xf32>
    %232 = math.exp %231 : vector<8x128xf32>
    %cst_41 = arith.constant 1.000000e+00 : f32
    %233 = vector.broadcast %cst_41 : f32 to vector<8x128xf32>
    %234 = arith.addf %233, %232 : vector<8x128xf32>
    %235 = arith.divf %233, %234 : vector<8x128xf32>
    %236 = vector.extract_strided_slice %235 {offsets = [0, 0], sizes = [8, 32], strides = [1, 1]} : vector<8x128xf32> to vector<8x32xf32>
    %237 = vector.extract_strided_slice %235 {offsets = [0, 32], sizes = [8, 32], strides = [1, 1]} : vector<8x128xf32> to vector<8x32xf32>
    %238 = vector.extract_strided_slice %235 {offsets = [0, 64], sizes = [8, 32], strides = [1, 1]} : vector<8x128xf32> to vector<8x32xf32>
    %cst_42 = arith.constant 2.000000e+00 : f32
    %239 = vector.broadcast %cst_42 : f32 to vector<8x32xf32>
    %240 = arith.mulf %239, %238 : vector<8x32xf32>
    %cst_43 = arith.constant 1.000000e+00 : f32
    %241 = vector.broadcast %cst_43 : f32 to vector<8x32xf32>
    %242 = arith.subf %240, %241 : vector<8x32xf32>
    %243 = vector.extract_strided_slice %235 {offsets = [0, 96], sizes = [8, 32], strides = [1, 1]} : vector<8x128xf32> to vector<8x32xf32>
    %244 = arith.mulf %237, %220 : vector<8x32xf32>
    %245 = arith.mulf %236, %242 : vector<8x32xf32>
    %246 = arith.addf %244, %245 : vector<8x32xf32>
    %247 = math.tanh %246 : vector<8x32xf32>
    %248 = arith.mulf %243, %247 : vector<8x32xf32>
    %c0_44 = arith.constant 0 : index
    %c0_45 = arith.constant 0 : index
    %249 = vector.load %arg6[%c0_44, %c0_45] : memref<8x32xf32, #tpu.memory_space<vmem>>, vector<8x32xf32>
    tpu.vector_store %arg6[%c0_44, %c0_45], %248 {strides = array<i32>} : memref<8x32xf32, #tpu.memory_space<vmem>>, vector<8x32xf32>,
    return
  }
  func.func @transform_0(%arg0: i32) -> (i32, i32) {
    %c0_i32 = arith.constant 0 : i32
    %c0_i32_0 = arith.constant 0 : i32
    return %arg0, %c0_i32 : i32, i32
  }
  func.func @transform_1(%arg0: i32) -> (i32, i32) {
    %c0_i32 = arith.constant 0 : i32
    %c0_i32_0 = arith.constant 0 : i32
    %c0_i32_1 = arith.constant 0 : i32
    return %c0_i32, %c0_i32_0 : i32, i32
  }
  func.func @transform_2(%arg0: i32) -> (i32, i32) {
    %c0_i32 = arith.constant 0 : i32
    %c0_i32_0 = arith.constant 0 : i32
    %c0_i32_1 = arith.constant 0 : i32
    return %c0_i32, %c0_i32_0 : i32, i32
  }
  func.func @transform_3(%arg0: i32) -> (i32, i32) {
    %c0_i32 = arith.constant 0 : i32
    %c0_i32_0 = arith.constant 0 : i32
    %c0_i32_1 = arith.constant 0 : i32
    return %c0_i32, %c0_i32_0 : i32, i32
  }
  func.func @transform_4(%arg0: i32) -> (i32, i32) {
    %c0_i32 = arith.constant 0 : i32
    %c0_i32_0 = arith.constant 0 : i32
    %c0_i32_1 = arith.constant 0 : i32
    return %c0_i32, %c0_i32_0 : i32, i32
  }
  func.func @transform_5(%arg0: i32) -> (i32, i32) {
    %c0_i32 = arith.constant 0 : i32
    %c0_i32_0 = arith.constant 0 : i32
    return %arg0, %c0_i32 : i32, i32
  }
}

</mosaic_0001>

<llo_original>
// kernel: tpu_custom_call.1
$region0: #{tpu_custom_call.1}
  #allocation0 [shape = 'u32[]', space=smem, size = 0x4, offset = 0x4, fixed_abs, tag = 'smem constant byte address 0x4 - core index']
  #allocation1 [shape = 'u32[72,128]{1,0:T(1,128)}', space=vmem, size = 0x9000, scoped, tag = 'internal scratch']
  %s0 = inlined_call_operand.vmem [shape: s32[128,1], index: 0, kind: input, shape index: {}]
  %s1 = inlined_call_operand.vmem [shape: f32[128,32], index: 1, kind: input, shape index: {}]
  %s2 = inlined_call_operand.vmem [shape: f32[32,128], index: 2, kind: input, shape index: {}]
  %s3 = inlined_call_operand.vmem [shape: f32[32,128], index: 3, kind: input, shape index: {}]
  %s4 = inlined_call_operand.vmem [shape: f32[1,128], index: 4, kind: input, shape index: {}]
  %s5 = inlined_call_operand.hbm [shape: f32[16,32], index: 5, kind: output, shape index: {}]
  %s6 = sld [smem:[#allocation0]]
  $region53: #{tpu_custom_call.1} parent=0
    _
  %s8 = ssub.s32 1, %s6
  %s9 = scalar_select 0, %s8, %s6
  $region1: #{tpu_custom_call.1} parent=0
    #allocation2 [shape = 'u8[8192]{0}', space=vmem, size = 0x2000, scoped, tag = 'output window, operand 0']
    #allocation3 [shape = 's32[2]{0}', space=sflag, size = 0x8, scoped, tag = 'scoped memory for tpu_custom_call.1']
    %10 = vsyncpa [#allocation3], 0
    %s11 = scalar_lea.sflag [#allocation3], 1
    %12 = vsyncpa %s11, 0
    loop: start=0, step=1, limit=4
    $region2: #{tpu_custom_call.1} parent=1 // loop_pre_header
      _
    $region3: #{tpu_custom_call.1} parent=1 // loop_header
      %s14 = sphi 0, %s18
      %p15 = scmp.ge.s32.totalorder %s14, 4
      %s24 = sphi 0, %s26
      %s27 = sphi 0, %s24
      %s28 = sphi 0, %s27
      %s44 = sphi 0, %s28
      %s48 = sphi 0, %s48
      %s50 = sphi 0, %s48
      %s51 = sphi 0, %s50
      %s65 = sphi 0, %s51
      %s69 = sphi 0, %s69
      %s71 = sphi 0, %s69
      %s72 = sphi 0, %s71
      %s86 = sphi 0, %s72
      %s90 = sphi 0, %s90
      %s92 = sphi 0, %s90
      %s93 = sphi 0, %s92
      %s107 = sphi 0, %s93
      %s111 = sphi 0, %s111
      %s113 = sphi 0, %s111
      %s114 = sphi 0, %s113
      %s128 = sphi 0, %s114
      %s134 = sphi 0, %s136
      %s137 = sphi 0, %s134
      %s138 = sphi 0, %s137
      %s154 = sphi 0, %s138
    $region4: #{tpu_custom_call.1} parent=1 // loop_header_branch
      %17 = sbr.rel (%p15) target = $region8
    $region5: #{tpu_custom_call.1} parent=1 // loop_body
      %s19 = ssub.s32 %s14, 1
      %s20 = ssub.s32 %s14, 2
      %s21 = sadd.s32 %s14, 1
      %s22 = ssub.s32 %s14, %s21
      %p23 = scmp.eq.s32.totalorder %s22, 0
      %s25 = sadd.s32 %s24, 1
      %s26 = scalar_select %p23, %s24, %s25
      %p29 = pneg %p23
      %p30 = scmp.eq.s32.totalorder %s14, 1
      %p31 = por %p29, %p30
      %p32 = scmp.ne.s32.totalorder %s24, %s27
      %p33 = scmp.eq.s32.totalorder %s14, 0
      %p34 = por %p32, %p33
      %p35 = scmp.ne.s32.totalorder %s24, %s27
      %p36 = scmp.eq.s32.totalorder %s19, 1
      %p37 = por %p35, %p36
      %p38 = scmp.ne.s32.totalorder %s27, %s28
      %p39 = scmp.eq.s32.totalorder %s19, 0
      %p40 = por %p38, %p39
      %p41 = scmp.ne.s32.totalorder %s27, %s28
      %p42 = scmp.eq.s32.totalorder %s20, 1
      %p43 = por %p41, %p42
      %p45 = scmp.ne.s32.totalorder %s28, %s44
      %p46 = scmp.eq.s32.totalorder %s20, 0
      %p47 = por %p45, %p46
      %s49 = sadd.s32 %s48, 1
      %p52 = scmp.eq.s32.totalorder %s14, 1
      %p53 = scmp.ne.s32.totalorder %s48, %s50
      %p54 = scmp.eq.s32.totalorder %s14, 0
      %p55 = por %p53, %p54
      %p56 = scmp.ne.s32.totalorder %s48, %s50
      %p57 = scmp.eq.s32.totalorder %s19, 1
      %p58 = por %p56, %p57
      %p59 = scmp.ne.s32.totalorder %s50, %s51
      %p60 = scmp.eq.s32.totalorder %s19, 0
      %p61 = por %p59, %p60
      %p62 = scmp.ne.s32.totalorder %s50, %s51
      %p63 = scmp.eq.s32.totalorder %s20, 1
      %p64 = por %p62, %p63
      %p66 = scmp.ne.s32.totalorder %s51, %s65
      %p67 = scmp.eq.s32.totalorder %s20, 0
      %p68 = por %p66, %p67
      %s70 = sadd.s32 %s69, 1
      %p73 = scmp.eq.s32.totalorder %s14, 1
      %p74 = scmp.ne.s32.totalorder %s69, %s71
      %p75 = scmp.eq.s32.totalorder %s14, 0
      %p76 = por %p74, %p75
      %p77 = scmp.ne.s32.totalorder %s69, %s71
      %p78 = scmp.eq.s32.totalorder %s19, 1
      %p79 = por %p77, %p78
      %p80 = scmp.ne.s32.totalorder %s71, %s72
      %p81 = scmp.eq.s32.totalorder %s19, 0
      %p82 = por %p80, %p81
      %p83 = scmp.ne.s32.totalorder %s71, %s72
      %p84 = scmp.eq.s32.totalorder %s20, 1
      %p85 = por %p83, %p84
      %p87 = scmp.ne.s32.totalorder %s72, %s86
      %p88 = scmp.eq.s32.totalorder %s20, 0
      %p89 = por %p87, %p88
      %s91 = sadd.s32 %s90, 1
      %p94 = scmp.eq.s32.totalorder %s14, 1
      %p95 = scmp.ne.s32.totalorder %s90, %s92
      %p96 = scmp.eq.s32.totalorder %s14, 0
      %p97 = por %p95, %p96
      %p98 = scmp.ne.s32.totalorder %s90, %s92
      %p99 = scmp.eq.s32.totalorder %s19, 1
      %p100 = por %p98, %p99
      %p101 = scmp.ne.s32.totalorder %s92, %s93
      %p102 = scmp.eq.s32.totalorder %s19, 0
      %p103 = por %p101, %p102
      %p104 = scmp.ne.s32.totalorder %s92, %s93
      %p105 = scmp.eq.s32.totalorder %s20, 1
      %p106 = por %p104, %p105
      %p108 = scmp.ne.s32.totalorder %s93, %s107
      %p109 = scmp.eq.s32.totalorder %s20, 0
      %p110 = por %p108, %p109
      %s112 = sadd.s32 %s111, 1
      %p115 = scmp.eq.s32.totalorder %s14, 1
      %p116 = scmp.ne.s32.totalorder %s111, %s113
      %p117 = scmp.eq.s32.totalorder %s14, 0
      %p118 = por %p116, %p117
      %p119 = scmp.ne.s32.totalorder %s111, %s113
      %p120 = scmp.eq.s32.totalorder %s19, 1
      %p121 = por %p119, %p120
      %p122 = scmp.ne.s32.totalorder %s113, %s114
      %p123 = scmp.eq.s32.totalorder %s19, 0
      %p124 = por %p122, %p123
      %p125 = scmp.ne.s32.totalorder %s113, %s114
      %p126 = scmp.eq.s32.totalorder %s20, 1
      %p127 = por %p125, %p126
      %p129 = scmp.ne.s32.totalorder %s114, %s128
      %p130 = scmp.eq.s32.totalorder %s20, 0
      %p131 = por %p129, %p130
      %s132 = ssub.s32 %s14, %s21
      %p133 = scmp.eq.s32.totalorder %s132, 0
      %s135 = sadd.s32 %s134, 1
      %s136 = scalar_select %p133, %s134, %s135
      %p139 = pneg %p133
      %p140 = scmp.eq.s32.totalorder %s14, 1
      %p141 = por %p139, %p140
      %p142 = scmp.ne.s32.totalorder %s134, %s137
      %p143 = scmp.eq.s32.totalorder %s14, 0
      %p144 = por %p142, %p143
      %p145 = scmp.ne.s32.totalorder %s134, %s137
      %p146 = scmp.eq.s32.totalorder %s19, 1
      %p147 = por %p145, %p146
      %p148 = scmp.ne.s32.totalorder %s137, %s138
      %p149 = scmp.eq.s32.totalorder %s19, 0
      %p150 = por %p148, %p149
      %p151 = scmp.ne.s32.totalorder %s137, %s138
      %p152 = scmp.eq.s32.totalorder %s20, 1
      %p153 = por %p151, %p152
      %p155 = scmp.ne.s32.totalorder %s138, %s154
      %p156 = scmp.eq.s32.totalorder %s20, 0
      %p157 = por %p155, %p156
      %p158 = scmp.le.s32.totalorder 1, %s14
      %p159 = scmp.lt.s32.totalorder %s14, 3
      %p160 = pnand %p158, %p159
      %p161 = pneg %p160
      // Predicated region
      $region9: #{tpu_custom_call.1} parent=5 // pred_check
        _
      $region10: #{tpu_custom_call.1} parent=5 // pred_check_branch
        %163 = sbr.rel (%p160) target = $region12
      $region11: #{tpu_custom_call.1} parent=5 // pred_region
        %s164 = ssub.s32 %s14, 1
        // Predicated region
        $region13: #{tpu_custom_call.1} parent=11 // pred_check
          %p165 = pneg %p61
        $region14: #{tpu_custom_call.1} parent=11 // pred_check_branch
          %167 = sbr.rel (%p165) target = $region16
        $region15: #{tpu_custom_call.1} parent=11 // pred_region
          _
        $region16: #{tpu_custom_call.1} parent=11 // pred_fallthru
          _
        // Predicated region
        $region17: #{tpu_custom_call.1} parent=11 // pred_check
          %p168 = pneg %p82
        $region18: #{tpu_custom_call.1} parent=11 // pred_check_branch
          %170 = sbr.rel (%p168) target = $region20
        $region19: #{tpu_custom_call.1} parent=11 // pred_region
          _
        $region20: #{tpu_custom_call.1} parent=11 // pred_fallthru
          _
        // Predicated region
        $region21: #{tpu_custom_call.1} parent=11 // pred_check
          %p171 = pneg %p103
        $region22: #{tpu_custom_call.1} parent=11 // pred_check_branch
          %173 = sbr.rel (%p171) target = $region24
        $region23: #{tpu_custom_call.1} parent=11 // pred_region
          _
        $region24: #{tpu_custom_call.1} parent=11 // pred_fallthru
          _
        // Predicated region
        $region25: #{tpu_custom_call.1} parent=11 // pred_check
          %p174 = pneg %p124
        $region26: #{tpu_custom_call.1} parent=11 // pred_check_branch
          %176 = sbr.rel (%p174) target = $region28
        $region27: #{tpu_custom_call.1} parent=11 // pred_region
          _
        $region28: #{tpu_custom_call.1} parent=11 // pred_fallthru
          _
      $region12: #{tpu_custom_call.1} parent=5 // pred_fallthru
        _
      %p177 = scmp.lt.s32.totalorder %s14, 2
      // Predicated region
      $region29: #{tpu_custom_call.1} parent=5 // pred_check
        %p178 = pneg %p177
      $region30: #{tpu_custom_call.1} parent=5 // pred_check_branch
        %180 = sbr.rel (%p178) target = $region32
      $region31: #{tpu_custom_call.1} parent=5 // pred_region
        // Predicated region
        $region33: #{tpu_custom_call.1} parent=31 // pred_check
          %p181 = pneg %p34
        $region34: #{tpu_custom_call.1} parent=31 // pred_check_branch
          %183 = sbr.rel (%p181) target = $region36
        $region35: #{tpu_custom_call.1} parent=31 // pred_region
          %s184 = smul.u32 8, %s14
          %p185 = scmp.lt.s32.totalorder %s184, 15
          %s186 = scalar_select %p185, %s184, 15
          %s187 = smul.addr %s186, 8
          %s188 = scalar_lea.vmem %s0, %s187
          %s189 = smul.u32 8, %s14
        $region36: #{tpu_custom_call.1} parent=31 // pred_fallthru
          _
      $region32: #{tpu_custom_call.1} parent=5 // pred_fallthru
        _
      %p190 = scmp.le.s32.totalorder 1, %s14
      %p191 = scmp.lt.s32.totalorder %s14, 3
      %p192 = pnand %p190, %p191
      %p193 = pneg %p192
      // Predicated region
      $region37: #{tpu_custom_call.1} parent=5 // pred_check
        _
      $region38: #{tpu_custom_call.1} parent=5 // pred_check_branch
        %195 = sbr.rel (%p192) target = $region40
      $region39: #{tpu_custom_call.1} parent=5 // pred_region
        %s196 = ssub.s32 %s14, 1
        %s197 = smul.u32 8, %s19
        %p198 = scmp.lt.s32.totalorder %s197, 15
        %s199 = scalar_select %p198, %s197, 15
        %s200 = smul.addr %s199, 8
        %s201 = scalar_lea.vmem %s0, %s200
        %p202 = pneg %p40
        %p203 = pneg %p37
        %p204 = pneg %p61
        %p205 = pneg %p58
        %p206 = pneg %p82
        %p207 = pneg %p79
        %p208 = pneg %p103
        %p209 = pneg %p100
        %p210 = pneg %p124
        %p211 = pneg %p121
        %p212 = pneg %p150
        %p213 = pneg %p147
        %s214 = sand.u32 %s137, 1
        %s215 = scalar_lea.sflag [#allocation3], %s214
        %s216 = sand.u32 %s137, 1
        %s217 = smul.addr %s216, 8
        %s218 = scalar_lea.vmem [#allocation2], %s217
        %s219 = smul.u32 8, %s19
        %p220 = scmp.lt.s32.totalorder %s219, 15
        %s221 = scalar_select %p220, %s219, 15
        %s222 = smul.addr %s221, 8
        %s223 = scalar_lea.vmem %s0, %s222
        %s224 = smul.u32 8, %s19
        %v226 = vld [vmem:[%s223] sm:$0xff]
        %v227 = vld [vmem:[%s223 + $0x8] sm:$0xff]
        %v228 = vld [vmem:[%s223 + $0x10] sm:$0xff]
        %v229 = vld [vmem:[%s223 + $0x18] sm:$0xff]
        %v230 = vld [vmem:[%s223 + $0x20] sm:$0xff]
        %v231 = vld [vmem:[%s223 + $0x28] sm:$0xff]
        %v232 = vld [vmem:[%s223 + $0x30] sm:$0xff]
        %v233 = vld [vmem:[%s223 + $0x38] sm:$0xff]
        %v234 = vlaneseq
        %v235 = vand.u32 %v234, 127
        %236 = vset.pattern.permute.xlu0 0
        %237 = vperm.xlu0 %236, %v226
        %v238 = vpop.permute.xlu0 %237
        %239 = vset.pattern.permute.xlu0 0
        %240 = vperm.xlu0 %239, %v227
        %v241 = vpop.permute.xlu0 %240
        %242 = vset.pattern.permute.xlu0 0
        %243 = vperm.xlu0 %242, %v228
        %v244 = vpop.permute.xlu0 %243
        %245 = vset.pattern.permute.xlu0 0
        %246 = vperm.xlu0 %245, %v229
        %v247 = vpop.permute.xlu0 %246
        %248 = vset.pattern.permute.xlu0 0
        %249 = vperm.xlu0 %248, %v230
        %v250 = vpop.permute.xlu0 %249
        %251 = vset.pattern.permute.xlu0 0
        %252 = vperm.xlu0 %251, %v231
        %v253 = vpop.permute.xlu0 %252
        %254 = vset.pattern.permute.xlu0 0
        %255 = vperm.xlu0 %254, %v232
        %v256 = vpop.permute.xlu0 %255
        %257 = vset.pattern.permute.xlu0 0
        %258 = vperm.xlu0 %257, %v233
        %v259 = vpop.permute.xlu0 %258
        %vm260 = vcmp.eq.s32.totalorder %v238, %v235
        %vm261 = vcmp.eq.s32.totalorder %v241, %v235
        %vm262 = vcmp.eq.s32.totalorder %v244, %v235
        %vm263 = vcmp.eq.s32.totalorder %v247, %v235
        %vm264 = vcmp.eq.s32.totalorder %v250, %v235
        %vm265 = vcmp.eq.s32.totalorder %v253, %v235
        %vm266 = vcmp.eq.s32.totalorder %v256, %v235
        %vm267 = vcmp.eq.s32.totalorder %v259, %v235
        %v268 = vsel %vm260, 1, 0
        %v269 = vsel %vm261, 1, 0
        %v270 = vsel %vm262, 1, 0
        %v271 = vsel %vm263, 1, 0
        %v272 = vsel %vm264, 1, 0
        %v273 = vsel %vm265, 1, 0
        %v274 = vsel %vm266, 1, 0
        %v275 = vsel %vm267, 1, 0
        %v276 = vcvt.s32.f32 %v268
        %v277 = vcvt.s32.f32 %v269
        %v278 = vcvt.s32.f32 %v270
        %v279 = vcvt.s32.f32 %v271
        %v280 = vcvt.s32.f32 %v272
        %v281 = vcvt.s32.f32 %v273
        %v282 = vcvt.s32.f32 %v274
        %v283 = vcvt.s32.f32 %v275
        %v284 = vld [vmem:[%s1] sm:$0xff]
        %v285 = vld [vmem:[%s1 + $0x8] sm:$0xff]
        %v286 = vld [vmem:[%s1 + $0x10] sm:$0xff]
        %v287 = vld [vmem:[%s1 + $0x18] sm:$0xff]
        %v288 = vld [vmem:[%s1 + $0x20] sm:$0xff]
        %v289 = vld [vmem:[%s1 + $0x28] sm:$0xff]
        %v290 = vld [vmem:[%s1 + $0x30] sm:$0xff]
        %v291 = vld [vmem:[%s1 + $0x38] sm:$0xff]
        %v292 = vld [vmem:[%s1 + $0x40] sm:$0xff]
        %v293 = vld [vmem:[%s1 + $0x48] sm:$0xff]
        %v294 = vld [vmem:[%s1 + $0x50] sm:$0xff]
        %v295 = vld [vmem:[%s1 + $0x58] sm:$0xff]
        %v296 = vld [vmem:[%s1 + $0x60] sm:$0xff]
        %v297 = vld [vmem:[%s1 + $0x68] sm:$0xff]
        %v298 = vld [vmem:[%s1 + $0x70] sm:$0xff]
        %v299 = vld [vmem:[%s1 + $0x78] sm:$0xff]
        %300 = vmatpush.msra.mxu0 %v299
        %301 = vmatpush.msra.mxu0 %v298
        %302 = vmatpush.msra.mxu0 %v297
        %303 = vmatpush.msra.mxu0 %v296
        %304 = vmatpush.msra.mxu0 %v295
        %305 = vmatpush.msra.mxu0 %v294
        %306 = vmatpush.msra.mxu0 %v293
        %307 = vmatpush.msra.mxu0 %v292
        %308 = vmatpush.msra.mxu0 %v291
        %309 = vmatpush.msra.mxu0 %v290
        %310 = vmatpush.msra.mxu0 %v289
        %311 = vmatpush.msra.mxu0 %v288
        %312 = vmatpush.msra.mxu0 %v287
        %313 = vmatpush.msra.mxu0 %v286
        %314 = vmatpush.msra.mxu0 %v285
        %315 = vmatpush.msra.mxu0 %v284
        %316 = vmatmul.f32.gmra.mxu0 %v276
        %v317 = vpop.f32.mrf.mxu0
        %v318 = vadd.f32 0.0, %v317
        %319 = vmatmul.f32.gmra.mxu0 %v277
        %v320 = vpop.f32.mrf.mxu0
        %v321 = vadd.f32 0.0, %v320
        %322 = vmatmul.f32.gmra.mxu0 %v278
        %v323 = vpop.f32.mrf.mxu0
        %v324 = vadd.f32 0.0, %v323
        %325 = vmatmul.f32.gmra.mxu0 %v279
        %v326 = vpop.f32.mrf.mxu0
        %v327 = vadd.f32 0.0, %v326
        %328 = vmatmul.f32.gmra.mxu0 %v280
        %v329 = vpop.f32.mrf.mxu0
        %v330 = vadd.f32 0.0, %v329
        %331 = vmatmul.f32.gmra.mxu0 %v281
        %v332 = vpop.f32.mrf.mxu0
        %v333 = vadd.f32 0.0, %v332
        %334 = vmatmul.f32.gmra.mxu0 %v282
        %v335 = vpop.f32.mrf.mxu0
        %v336 = vadd.f32 0.0, %v335
        %337 = vmatmul.f32.gmra.mxu0 %v283
        %v338 = vpop.f32.mrf.mxu0
        %v339 = vadd.f32 0.0, %v338
        %340 = vdwg.mxu0
        %v341 = vld [vmem:[%s2] sm:$0xff]
        %v342 = vld [vmem:[%s2 + $0x8] sm:$0xff]
        %v343 = vld [vmem:[%s2 + $0x10] sm:$0xff]
        %v344 = vld [vmem:[%s2 + $0x18] sm:$0xff]
        %v345 = vld [vmem:[%s4] sm:$0x1]
        %v347 = vperm.slane %v345, 0
        %vm349 = vcmask 261120
        %v351 = vsel %vm349, %v318, 0
        %v354 = vsel %vm349, %v321, 0
        %v357 = vsel %vm349, %v324, 0
        %v360 = vsel %vm349, %v327, 0
        %v363 = vsel %vm349, %v330, 0
        %v366 = vsel %vm349, %v333, 0
        %v369 = vsel %vm349, %v336, 0
        %v372 = vsel %vm349, %v339, 0
        %374 = vmatpush.msra.mxu0 0.0
        %375 = vmatpush.msra.mxu0 0.0
        %376 = vmatpush.msra.mxu0 0.0
        %377 = vmatpush.msra.mxu0 0.0
        %378 = vmatpush.msra.mxu0 0.0
        %379 = vmatpush.msra.mxu0 0.0
        %380 = vmatpush.msra.mxu0 0.0
        %381 = vmatpush.msra.mxu0 0.0
        %382 = vmatpush.msra.mxu0 0.0
        %383 = vmatpush.msra.mxu0 0.0
        %384 = vmatpush.msra.mxu0 0.0
        %385 = vmatpush.msra.mxu0 0.0
        %386 = vmatpush.msra.mxu0 %v344
        %387 = vmatpush.msra.mxu0 %v343
        %388 = vmatpush.msra.mxu0 %v342
        %389 = vmatpush.msra.mxu0 %v341
        %390 = vmatmul.f32.gmra.mxu0 %v351
        %v391 = vpop.f32.mrf.mxu0
        %v392 = vadd.f32 %v347, %v391
        %393 = vmatmul.f32.gmra.mxu0 %v354
        %v394 = vpop.f32.mrf.mxu0
        %v395 = vadd.f32 %v347, %v394
        %396 = vmatmul.f32.gmra.mxu0 %v357
        %v397 = vpop.f32.mrf.mxu0
        %v398 = vadd.f32 %v347, %v397
        %399 = vmatmul.f32.gmra.mxu0 %v360
        %v400 = vpop.f32.mrf.mxu0
        %v401 = vadd.f32 %v347, %v400
        %402 = vmatmul.f32.gmra.mxu0 %v363
        %v403 = vpop.f32.mrf.mxu0
        %v404 = vadd.f32 %v347, %v403
        %405 = vmatmul.f32.gmra.mxu0 %v366
        %v406 = vpop.f32.mrf.mxu0
        %v407 = vadd.f32 %v347, %v406
        %408 = vmatmul.f32.gmra.mxu0 %v369
        %v409 = vpop.f32.mrf.mxu0
        %v410 = vadd.f32 %v347, %v409
        %411 = vmatmul.f32.gmra.mxu0 %v372
        %v412 = vpop.f32.mrf.mxu0
        %v413 = vadd.f32 %v347, %v412
        %414 = vdwg.mxu0
        %vm415 = vcmp.ge.s32.totalorder %v235, 0
        %vm416 = vcmp.lt.s32.totalorder %v235, 16
        %vm417 = vmand %vm415, %vm416
        %vm418 = vcmp.ge.s32.totalorder %v235, 32
        %vm419 = vcmp.lt.s32.totalorder %v235, 48
        %vm420 = vmand %vm418, %vm419
        %vm421 = vmor %vm417, %vm420
        %vm422 = vcmp.ge.s32.totalorder %v235, 64
        %vm423 = vcmp.lt.s32.totalorder %v235, 80
        %vm424 = vmand %vm422, %vm423
        %vm425 = vmor %vm421, %vm424
        %vm426 = vcmp.ge.s32.totalorder %v235, 96
        %vm427 = vcmp.lt.s32.totalorder %v235, 112
        %vm428 = vmand %vm426, %vm427
        %vm429 = vmor %vm425, %vm428
        %v430 = vld [vmem:[%s3] sm:$0xff]
        %v431 = vld [vmem:[%s3 + $0x8] sm:$0xff]
        %v432 = vld [vmem:[%s3 + $0x10] sm:$0xff]
        %v433 = vld [vmem:[%s3 + $0x18] sm:$0xff]
        %v434 = vpack.c.bf16 %v431, %v430
        %v435 = vpack.c.bf16 %v433, %v432
        %v436 = vsel %vm429, 1, 0
        %vm437 = vcmp.eq.s32.totalorder %v436, 1
        %v438 = vsel %vm437, %v392, %v413
        %v440 = vsel %vm349, 0, 0
        %442 = vmatpush.bf16.msra.mxu0 0
        %443 = vmatpush.bf16.msra.mxu0 0
        %444 = vmatpush.bf16.msra.mxu0 0
        %445 = vmatpush.bf16.msra.mxu0 0
        %446 = vmatpush.bf16.msra.mxu0 0
        %447 = vmatpush.bf16.msra.mxu0 0
        %448 = vmatpush.bf16.msra.mxu0 %v435
        %449 = vmatpush.bf16.msra.mxu0 %v434
        %450 = vmatmul.bf16.gmra.mxu0 %v440
        %v451 = vpop.f32.mrf.mxu0
        %v452 = vadd.f32 0.0, %v451
        %v453 = vpop.f32.mrf.mxu0
        %454 = vdwg.mxu0
        %v455 = vadd.f32 %v438, %v452
        %v456 = vxor.u32 %v455, 2147483648
        %v457 = vmul.f32 %v456, 1.442695
        %v458 = vpow.pop %v457
        %v459 = vadd.f32 %v458, 1.0
        %v460 = vrcp.pop %v459
        %v461 = vmul.f32 %v459, %v460
        %v462 = vsub.f32 1.0, %v461
        %v463 = vmul.f32 %v460, %v462
        %v464 = vadd.f32 %v460, %v463
        %vm465 = vweird.f32 %v459
        %vm466 = vweird.f32 %v460
        %vm467 = vmor %vm465, %vm466
        %v468 = vsel %vm467, %v460, %v464
        %v469 = vand.u32 2147483647, %v459
        %vm470 = vcmp.eq.f32.partialorder %v469, 8.507059e+37
        %v471 = vand.u32 %v459, 2147483648
        %v472 = vor.u32 1.1754944e-38, %v471
        %v473 = vsel %vm470, %v472, %v468
        %v474 = vmul.f32 1.0, %v473
        %v475 = vmul.f32 %v474, 2.0
        %v476 = vsub.f32 %v475, 1.0
        %v477 = vmul.f32 %v474, 0.0
        %479 = vrot.lane.b32.xlu0 %v476, 64
        %v480 = vpop.permute.xlu0 %479
        %v482 = vmul.f32 %v474, %v480
        %484 = vrot.lane.b32.xlu0 %v482, 32
        %v485 = vpop.permute.xlu0 %484
        %v487 = vadd.f32 %v477, %v485
        %v488 = vtanh.pop %v487
        %490 = vrot.lane.b32.xlu0 %v488, 64
        %v491 = vpop.permute.xlu0 %490
        %v493 = vmul.f32 %v474, %v491
        %v494 = vsel %vm437, %v395, %v410
        %v495 = vpack.c.bf16 %v493, %v493
        %497 = vrot.lane.b32.xlu0 %v495, 32
        %v498 = vpop.permute.xlu0 %497
        %v500 = vsel %vm349, %v498, 0
        %502 = vmatpush.bf16.msra.mxu0 0
        %503 = vmatpush.bf16.msra.mxu0 0
        %504 = vmatpush.bf16.msra.mxu0 0
        %505 = vmatpush.bf16.msra.mxu0 0
        %506 = vmatpush.bf16.msra.mxu0 0
        %507 = vmatpush.bf16.msra.mxu0 0
        %508 = vmatpush.bf16.msra.mxu0 %v435
        %509 = vmatpush.bf16.msra.mxu0 %v434
        %510 = vmatmul.bf16.gmra.mxu0 %v500
        %v511 = vpop.f32.mrf.mxu0
        %v512 = vadd.f32 0.0, %v511
        %v513 = vpop.f32.mrf.mxu0
        %514 = vdwg.mxu0
        %v515 = vadd.f32 %v494, %v512
        %v516 = vxor.u32 %v515, 2147483648
        %v517 = vmul.f32 %v516, 1.442695
        %v518 = vpow.pop %v517
        %v519 = vadd.f32 %v518, 1.0
        %v520 = vrcp.pop %v519
        %v521 = vmul.f32 %v519, %v520
        %v522 = vsub.f32 1.0, %v521
        %v523 = vmul.f32 %v520, %v522
        %v524 = vadd.f32 %v520, %v523
        %vm525 = vweird.f32 %v519
        %vm526 = vweird.f32 %v520
        %vm527 = vmor %vm525, %vm526
        %v528 = vsel %vm527, %v520, %v524
        %v529 = vand.u32 2147483647, %v519
        %vm530 = vcmp.eq.f32.partialorder %v529, 8.507059e+37
        %v531 = vand.u32 %v519, 2147483648
        %v532 = vor.u32 1.1754944e-38, %v531
        %v533 = vsel %vm530, %v532, %v528
        %v534 = vmul.f32 1.0, %v533
        %v535 = vmul.f32 %v534, 2.0
        %v536 = vsub.f32 %v535, 1.0
        %v537 = vmul.f32 %v534, %v487
        %539 = vrot.lane.b32.xlu0 %v536, 64
        %v540 = vpop.permute.xlu0 %539
        %v542 = vmul.f32 %v534, %v540
        %544 = vrot.lane.b32.xlu0 %v542, 32
        %v545 = vpop.permute.xlu0 %544
        %v547 = vadd.f32 %v537, %v545
        %v548 = vtanh.pop %v547
        %550 = vrot.lane.b32.xlu0 %v548, 64
        %v551 = vpop.permute.xlu0 %550
        %v553 = vmul.f32 %v534, %v551
        %v554 = vsel %vm437, %v398, %v407
        %v555 = vpack.c.bf16 %v553, %v553
        %557 = vrot.lane.b32.xlu0 %v555, 32
        %v558 = vpop.permute.xlu0 %557
        %v560 = vsel %vm349, %v558, 0
        %562 = vmatpush.bf16.msra.mxu0 0
        %563 = vmatpush.bf16.msra.mxu0 0
        %564 = vmatpush.bf16.msra.mxu0 0
        %565 = vmatpush.bf16.msra.mxu0 0
        %566 = vmatpush.bf16.msra.mxu0 0
        %567 = vmatpush.bf16.msra.mxu0 0
        %568 = vmatpush.bf16.msra.mxu0 %v435
        %569 = vmatpush.bf16.msra.mxu0 %v434
        %570 = vmatmul.bf16.gmra.mxu0 %v560
        %v571 = vpop.f32.mrf.mxu0
        %v572 = vadd.f32 0.0, %v571
        %v573 = vpop.f32.mrf.mxu0
        %574 = vdwg.mxu0
        %v575 = vadd.f32 %v554, %v572
        %v576 = vxor.u32 %v575, 2147483648
        %v577 = vmul.f32 %v576, 1.442695
        %v578 = vpow.pop %v577
        %v579 = vadd.f32 %v578, 1.0
        %v580 = vrcp.pop %v579
        %v581 = vmul.f32 %v579, %v580
        %v582 = vsub.f32 1.0, %v581
        %v583 = vmul.f32 %v580, %v582
        %v584 = vadd.f32 %v580, %v583
        %vm585 = vweird.f32 %v579
        %vm586 = vweird.f32 %v580
        %vm587 = vmor %vm585, %vm586
        %v588 = vsel %vm587, %v580, %v584
        %v589 = vand.u32 2147483647, %v579
        %vm590 = vcmp.eq.f32.partialorder %v589, 8.507059e+37
        %v591 = vand.u32 %v579, 2147483648
        %v592 = vor.u32 1.1754944e-38, %v591
        %v593 = vsel %vm590, %v592, %v588
        %v594 = vmul.f32 1.0, %v593
        %v595 = vmul.f32 %v594, 2.0
        %v596 = vsub.f32 %v595, 1.0
        %v597 = vmul.f32 %v594, %v547
        %599 = vrot.lane.b32.xlu0 %v596, 64
        %v600 = vpop.permute.xlu0 %599
        %v602 = vmul.f32 %v594, %v600
        %604 = vrot.lane.b32.xlu0 %v602, 32
        %v605 = vpop.permute.xlu0 %604
        %v607 = vadd.f32 %v597, %v605
        %v608 = vtanh.pop %v607
        %610 = vrot.lane.b32.xlu0 %v608, 64
        %v611 = vpop.permute.xlu0 %610
        %v613 = vmul.f32 %v594, %v611
        %v614 = vsel %vm437, %v401, %v404
        %v615 = vpack.c.bf16 %v613, %v613
        %617 = vrot.lane.b32.xlu0 %v615, 32
        %v618 = vpop.permute.xlu0 %617
        %v620 = vsel %vm349, %v618, 0
        %622 = vmatpush.bf16.msra.mxu0 0
        %623 = vmatpush.bf16.msra.mxu0 0
        %624 = vmatpush.bf16.msra.mxu0 0
        %625 = vmatpush.bf16.msra.mxu0 0
        %626 = vmatpush.bf16.msra.mxu0 0
        %627 = vmatpush.bf16.msra.mxu0 0
        %628 = vmatpush.bf16.msra.mxu0 %v435
        %629 = vmatpush.bf16.msra.mxu0 %v434
        %630 = vmatmul.bf16.gmra.mxu0 %v620
        %v631 = vpop.f32.mrf.mxu0
        %v632 = vadd.f32 0.0, %v631
        %v633 = vpop.f32.mrf.mxu0
        %634 = vdwg.mxu0
        %v635 = vadd.f32 %v614, %v632
        %v636 = vxor.u32 %v635, 2147483648
        %v637 = vmul.f32 %v636, 1.442695
        %v638 = vpow.pop %v637
        %v639 = vadd.f32 %v638, 1.0
        %v640 = vrcp.pop %v639
        %v641 = vmul.f32 %v639, %v640
        %v642 = vsub.f32 1.0, %v641
        %v643 = vmul.f32 %v640, %v642
        %v644 = vadd.f32 %v640, %v643
        %vm645 = vweird.f32 %v639
        %vm646 = vweird.f32 %v640
        %vm647 = vmor %vm645, %vm646
        %v648 = vsel %vm647, %v640, %v644
        %v649 = vand.u32 2147483647, %v639
        %vm650 = vcmp.eq.f32.partialorder %v649, 8.507059e+37
        %v651 = vand.u32 %v639, 2147483648
        %v652 = vor.u32 1.1754944e-38, %v651
        %v653 = vsel %vm650, %v652, %v648
        %v654 = vmul.f32 1.0, %v653
        %v655 = vmul.f32 %v654, 2.0
        %v656 = vsub.f32 %v655, 1.0
        %v657 = vmul.f32 %v654, %v607
        %659 = vrot.lane.b32.xlu0 %v656, 64
        %v660 = vpop.permute.xlu0 %659
        %v662 = vmul.f32 %v654, %v660
        %664 = vrot.lane.b32.xlu0 %v662, 32
        %v665 = vpop.permute.xlu0 %664
        %v667 = vadd.f32 %v657, %v665
        %v668 = vtanh.pop %v667
        %670 = vrot.lane.b32.xlu0 %v668, 64
        %v671 = vpop.permute.xlu0 %670
        %v673 = vmul.f32 %v654, %v671
        %v674 = vsel %vm437, %v404, %v401
        %v675 = vpack.c.bf16 %v673, %v673
        %677 = vrot.lane.b32.xlu0 %v675, 32
        %v678 = vpop.permute.xlu0 %677
        %v680 = vsel %vm349, %v678, 0
        %682 = vmatpush.bf16.msra.mxu0 0
        %683 = vmatpush.bf16.msra.mxu0 0
        %684 = vmatpush.bf16.msra.mxu0 0
        %685 = vmatpush.bf16.msra.mxu0 0
        %686 = vmatpush.bf16.msra.mxu0 0
        %687 = vmatpush.bf16.msra.mxu0 0
        %688 = vmatpush.bf16.msra.mxu0 %v435
        %689 = vmatpush.bf16.msra.mxu0 %v434
        %690 = vmatmul.bf16.gmra.mxu0 %v680
        %v691 = vpop.f32.mrf.mxu0
        %v692 = vadd.f32 0.0, %v691
        %v693 = vpop.f32.mrf.mxu0
        %694 = vdwg.mxu0
        %v695 = vadd.f32 %v674, %v692
        %v696 = vxor.u32 %v695, 2147483648
        %v697 = vmul.f32 %v696, 1.442695
        %v698 = vpow.pop %v697
        %v699 = vadd.f32 %v698, 1.0
        %v700 = vrcp.pop %v699
        %v701 = vmul.f32 %v699, %v700
        %v702 = vsub.f32 1.0, %v701
        %v703 = vmul.f32 %v700, %v702
        %v704 = vadd.f32 %v700, %v703
        %vm705 = vweird.f32 %v699
        %vm706 = vweird.f32 %v700
        %vm707 = vmor %vm705, %vm706
        %v708 = vsel %vm707, %v700, %v704
        %v709 = vand.u32 2147483647, %v699
        %vm710 = vcmp.eq.f32.partialorder %v709, 8.507059e+37
        %v711 = vand.u32 %v699, 2147483648
        %v712 = vor.u32 1.1754944e-38, %v711
        %v713 = vsel %vm710, %v712, %v708
        %v714 = vmul.f32 1.0, %v713
        %v715 = vmul.f32 %v714, 2.0
        %v716 = vsub.f32 %v715, 1.0
        %v717 = vmul.f32 %v714, %v667
        %719 = vrot.lane.b32.xlu0 %v716, 64
        %v720 = vpop.permute.xlu0 %719
        %v722 = vmul.f32 %v714, %v720
        %724 = vrot.lane.b32.xlu0 %v722, 32
        %v725 = vpop.permute.xlu0 %724
        %v727 = vadd.f32 %v717, %v725
        %v728 = vtanh.pop %v727
        %730 = vrot.lane.b32.xlu0 %v728, 64
        %v731 = vpop.permute.xlu0 %730
        %v733 = vmul.f32 %v714, %v731
        %v734 = vsel %vm437, %v407, %v398
        %v735 = vpack.c.bf16 %v733, %v733
        %737 = vrot.lane.b32.xlu0 %v735, 32
        %v738 = vpop.permute.xlu0 %737
        %v740 = vsel %vm349, %v738, 0
        %742 = vmatpush.bf16.msra.mxu0 0
        %743 = vmatpush.bf16.msra.mxu0 0
        %744 = vmatpush.bf16.msra.mxu0 0
        %745 = vmatpush.bf16.msra.mxu0 0
        %746 = vmatpush.bf16.msra.mxu0 0
        %747 = vmatpush.bf16.msra.mxu0 0
        %748 = vmatpush.bf16.msra.mxu0 %v435
        %749 = vmatpush.bf16.msra.mxu0 %v434
        %750 = vmatmul.bf16.gmra.mxu0 %v740
        %v751 = vpop.f32.mrf.mxu0
        %v752 = vadd.f32 0.0, %v751
        %v753 = vpop.f32.mrf.mxu0
        %754 = vdwg.mxu0
        %v755 = vadd.f32 %v734, %v752
        %v756 = vxor.u32 %v755, 2147483648
        %v757 = vmul.f32 %v756, 1.442695
        %v758 = vpow.pop %v757
        %v759 = vadd.f32 %v758, 1.0
        %v760 = vrcp.pop %v759
        %v761 = vmul.f32 %v759, %v760
        %v762 = vsub.f32 1.0, %v761
        %v763 = vmul.f32 %v760, %v762
        %v764 = vadd.f32 %v760, %v763
        %vm765 = vweird.f32 %v759
        %vm766 = vweird.f32 %v760
        %vm767 = vmor %vm765, %vm766
        %v768 = vsel %vm767, %v760, %v764
        %v769 = vand.u32 2147483647, %v759
        %vm770 = vcmp.eq.f32.partialorder %v769, 8.507059e+37
        %v771 = vand.u32 %v759, 2147483648
        %v772 = vor.u32 1.1754944e-38, %v771
        %v773 = vsel %vm770, %v772, %v768
        %v774 = vmul.f32 1.0, %v773
        %v775 = vmul.f32 %v774, 2.0
        %v776 = vsub.f32 %v775, 1.0
        %v777 = vmul.f32 %v774, %v727
        %779 = vrot.lane.b32.xlu0 %v776, 64
        %v780 = vpop.permute.xlu0 %779
        %v782 = vmul.f32 %v774, %v780
        %784 = vrot.lane.b32.xlu0 %v782, 32
        %v785 = vpop.permute.xlu0 %784
        %v787 = vadd.f32 %v777, %v785
        %v788 = vtanh.pop %v787
        %790 = vrot.lane.b32.xlu0 %v788, 64
        %v791 = vpop.permute.xlu0 %790
        %v793 = vmul.f32 %v774, %v791
        %v794 = vsel %vm437, %v410, %v395
        %v795 = vpack.c.bf16 %v793, %v793
        %797 = vrot.lane.b32.xlu0 %v795, 32
        %v798 = vpop.permute.xlu0 %797
        %v800 = vsel %vm349, %v798, 0
        %802 = vmatpush.bf16.msra.mxu0 0
        %803 = vmatpush.bf16.msra.mxu0 0
        %804 = vmatpush.bf16.msra.mxu0 0
        %805 = vmatpush.bf16.msra.mxu0 0
        %806 = vmatpush.bf16.msra.mxu0 0
        %807 = vmatpush.bf16.msra.mxu0 0
        %808 = vmatpush.bf16.msra.mxu0 %v435
        %809 = vmatpush.bf16.msra.mxu0 %v434
        %810 = vmatmul.bf16.gmra.mxu0 %v800
        %v811 = vpop.f32.mrf.mxu0
        %v812 = vadd.f32 0.0, %v811
        %v813 = vpop.f32.mrf.mxu0
        %814 = vdwg.mxu0
        %v815 = vadd.f32 %v794, %v812
        %v816 = vxor.u32 %v815, 2147483648
        %v817 = vmul.f32 %v816, 1.442695
        %v818 = vpow.pop %v817
        %v819 = vadd.f32 %v818, 1.0
        %v820 = vrcp.pop %v819
        %v821 = vmul.f32 %v819, %v820
        %v822 = vsub.f32 1.0, %v821
        %v823 = vmul.f32 %v820, %v822
        %v824 = vadd.f32 %v820, %v823
        %vm825 = vweird.f32 %v819
        %vm826 = vweird.f32 %v820
        %vm827 = vmor %vm825, %vm826
        %v828 = vsel %vm827, %v820, %v824
        %v829 = vand.u32 2147483647, %v819
        %vm830 = vcmp.eq.f32.partialorder %v829, 8.507059e+37
        %v831 = vand.u32 %v819, 2147483648
        %v832 = vor.u32 1.1754944e-38, %v831
        %v833 = vsel %vm830, %v832, %v828
        %v834 = vmul.f32 1.0, %v833
        %v835 = vmul.f32 %v834, 2.0
        %v836 = vsub.f32 %v835, 1.0
        %v837 = vmul.f32 %v834, %v787
        %839 = vrot.lane.b32.xlu0 %v836, 64
        %v840 = vpop.permute.xlu0 %839
        %v842 = vmul.f32 %v834, %v840
        %844 = vrot.lane.b32.xlu0 %v842, 32
        %v845 = vpop.permute.xlu0 %844
        %v847 = vadd.f32 %v837, %v845
        %v848 = vtanh.pop %v847
        %850 = vrot.lane.b32.xlu0 %v848, 64
        %v851 = vpop.permute.xlu0 %850
        %v853 = vmul.f32 %v834, %v851
        %v854 = vsel %vm437, %v413, %v392
        %v855 = vpack.c.bf16 %v853, %v853
        %857 = vrot.lane.b32.xlu0 %v855, 32
        %v858 = vpop.permute.xlu0 %857
        %v860 = vsel %vm349, %v858, 0
        %862 = vmatpush.bf16.msra.mxu0 0
        %863 = vmatpush.bf16.msra.mxu0 0
        %864 = vmatpush.bf16.msra.mxu0 0
        %865 = vmatpush.bf16.msra.mxu0 0
        %866 = vmatpush.bf16.msra.mxu0 0
        %867 = vmatpush.bf16.msra.mxu0 0
        %868 = vmatpush.bf16.msra.mxu0 %v435
        %869 = vmatpush.bf16.msra.mxu0 %v434
        %870 = vmatmul.bf16.gmra.mxu0 %v860
        %v871 = vpop.f32.mrf.mxu0
        %v872 = vadd.f32 0.0, %v871
        %v873 = vpop.f32.mrf.mxu0
        %874 = vdwg.mxu0
        %v875 = vadd.f32 %v854, %v872
        %v876 = vxor.u32 %v875, 2147483648
        %v877 = vmul.f32 %v876, 1.442695
        %v878 = vpow.pop %v877
        %v879 = vadd.f32 %v878, 1.0
        %v880 = vrcp.pop %v879
        %v881 = vmul.f32 %v879, %v880
        %v882 = vsub.f32 1.0, %v881
        %v883 = vmul.f32 %v880, %v882
        %v884 = vadd.f32 %v880, %v883
        %vm885 = vweird.f32 %v879
        %vm886 = vweird.f32 %v880
        %vm887 = vmor %vm885, %vm886
        %v888 = vsel %vm887, %v880, %v884
        %v889 = vand.u32 2147483647, %v879
        %vm890 = vcmp.eq.f32.partialorder %v889, 8.507059e+37
        %v891 = vand.u32 %v879, 2147483648
        %v892 = vor.u32 1.1754944e-38, %v891
        %v893 = vsel %vm890, %v892, %v888
        %v894 = vmul.f32 1.0, %v893
        %v895 = vmul.f32 %v894, 2.0
        %v896 = vsub.f32 %v895, 1.0
        %v897 = vmul.f32 %v894, %v847
        %899 = vrot.lane.b32.xlu0 %v896, 64
        %v900 = vpop.permute.xlu0 %899
        %v902 = vmul.f32 %v894, %v900
        %904 = vrot.lane.b32.xlu0 %v902, 32
        %v905 = vpop.permute.xlu0 %904
        %v907 = vadd.f32 %v897, %v905
        %v908 = vtanh.pop %v907
        %910 = vrot.lane.b32.xlu0 %v908, 64
        %v911 = vpop.permute.xlu0 %910
        %v913 = vmul.f32 %v894, %v911
        %915 = vrot.lane.b32.xlu0 %v913, 32
        %v916 = vpop.permute.xlu0 %915
        %918 = vst.msk [vmem:[%s218] sm:$0xff] %vm349, %v916
        %s919 = sand.u32 %s137, 1
        %s920 = scalar_lea.sflag [#allocation3], %s919
        %s921 = sand.u32 %s137, 1
        %s922 = smul.addr %s921, 8
        %s923 = scalar_lea.vmem [#allocation2], %s922
        // Predicated region
        $region41: #{tpu_custom_call.1} parent=39 // pred_check
          %p924 = pneg %p147
        $region42: #{tpu_custom_call.1} parent=39 // pred_check_branch
          %926 = sbr.rel (%p924) target = $region44
        $region43: #{tpu_custom_call.1} parent=39 // pred_region
          %928 = vsyncadd %s920, 0
          %s929 = smul.addr %s19, 8
          %s930 = scalar_lea.hbm %s5, %s929
          %s932 = sshll.u32 %s923, 4
          %s933 = int_to_ptr.vmem [resolvable:$true] %s932
          %s934 = sshll.u32 %s930, 4
          %s935 = int_to_ptr.hbm [resolvable:$true] %s934
          %937 = dma.vmem_to_hbm [thread:$0]  %s933, 128, %s935, %s920
        $region44: #{tpu_custom_call.1} parent=39 // pred_fallthru
          _
      $region40: #{tpu_custom_call.1} parent=5 // pred_fallthru
        _
      %p938 = scmp.le.s32.totalorder 2, %s14
      // Predicated region
      $region45: #{tpu_custom_call.1} parent=5 // pred_check
        %p939 = pneg %p938
      $region46: #{tpu_custom_call.1} parent=5 // pred_check_branch
        %941 = sbr.rel (%p939) target = $region48
      $region47: #{tpu_custom_call.1} parent=5 // pred_region
        %s942 = ssub.s32 %s14, 2
        // Predicated region
        $region49: #{tpu_custom_call.1} parent=47 // pred_check
          %p943 = pneg %p153
        $region50: #{tpu_custom_call.1} parent=47 // pred_check_branch
          %945 = sbr.rel (%p943) target = $region52
        $region51: #{tpu_custom_call.1} parent=47 // pred_region
          %s946 = sand.u32 %s138, 1
          %s947 = scalar_lea.sflag [#allocation3], %s946
          %s948 = sand.u32 %s138, 1
          %s949 = smul.addr %s948, 8
          %s950 = scalar_lea.vmem [#allocation2], %s949
          %952 = dma.done %s947, 128
        $region52: #{tpu_custom_call.1} parent=47 // pred_fallthru
          _
      $region48: #{tpu_custom_call.1} parent=5 // pred_fallthru
        _
    $region6: #{tpu_custom_call.1} parent=1 // loop_footer
      %s18 = sadd.s32 1, %s14
    $region7: #{tpu_custom_call.1} parent=1 // loop_footer_branch
      %13 = sbr.rel target = $region3
    $region8: #{tpu_custom_call.1} parent=1 // loop_exit
      _
    %953 = vsyncpa [#allocation3], 1
    %s954 = scalar_lea.sflag [#allocation3], 1
    %955 = vsyncpa %s954, 1

</llo_original>
